<compile_context>
chip_gen: v6e
topology: v6e:2x2x1
jax: 0.10.0
libtpu: 0.0.40
codegen_flags: <defaults>
</compile_context>

<pallas_src>
import functools

import jax
import jax.numpy as jnp
from jax import lax
from jax.experimental import pallas as pl
from jax.experimental.pallas import tpu as pltpu

_EPS = 1e-8            # torch cosine_similarity clamp on the norm
_EPS_SQ = _EPS * _EPS  # same clamp expressed on the sum of squares


def _triplet_loss_kernel(a_ref, p_ref, n_ref, o_ref, *, margin, mxu_reduce):
    # One (TB, D) batch tile per grid step. Everything is row-wise, so tiles
    # are fully independent (grid axis stays "parallel").
    if mxu_reduce:
        # Sub-f32 inputs: products in the native dtype, D-reduction as a
        # (TB, D) @ (D, 1) matmul with f32 accumulation (MXU slot, no casts,
        # no VALU adds).
        a, p, n = a_ref[...], p_ref[...], n_ref[...]
        ones = jnp.ones((a_ref.shape[-1], 1), dtype=a.dtype)

        def rowsum(x, y):
            return jnp.dot(x * y, ones, preferred_element_type=jnp.float32)
    else:
        a = a_ref[...].astype(jnp.float32)
        p = p_ref[...].astype(jnp.float32)
        n = n_ref[...].astype(jnp.float32)

        def rowsum(x, y):
            return jnp.sum(x * y, axis=-1, keepdims=True)

    ssa = rowsum(a, a)                              # (TB, 1)
    ssp = rowsum(p, p)
    ssn = rowsum(n, n)
    ap = rowsum(a, p)
    an = rowsum(a, n)

    # rsqrt(max(ss, eps^2)) == 1 / max(||x||, eps): exact torch semantics.
    inv_a = lax.rsqrt(jnp.maximum(ssa, _EPS_SQ))
    inv_p = lax.rsqrt(jnp.maximum(ssp, _EPS_SQ))
    inv_n = lax.rsqrt(jnp.maximum(ssn, _EPS_SQ))

    pos_sim = ap * inv_a * inv_p                    # (TB, 1)
    neg_sim = an * inv_a * inv_n                    # (TB, 1)

    o_ref[...] = jnp.maximum(neg_sim - pos_sim + margin, 0.0)


def _vmem_capacity_bytes():
    """Physical VMEM per TensorCore; falls back to 128 MiB (v5e/v6e)."""
    try:
        info = pltpu.get_tpu_info()
        for attr in ("vmem_capacity_bytes", "vmem_size_bytes"):
            cap = getattr(info, attr, None)
            if cap:
                return int(cap)
    except Exception:
        pass
    return 128 * 1024 * 1024


def _pick_block_rows(batch, dim, itemsize, mxu_reduce, budget_bytes,
                     per_input_tile_target=8 * 1024 * 1024):
    """Largest batch tile whose true VMEM footprint fits the budget."""
    # Packed-sublane alignment: 8 rows for 4B dtypes, 16 for bf16, 32 for int8.
    row_align = max(8, 32 // max(itemsize, 1))

    # True per-row footprint: 3 inputs x 2 pipeline buffers, plus in-kernel
    # temporaries (f32 upcast copies when we cast, product/reduce temps).
    per_row = 3 * 2 * dim * itemsize
    if itemsize < 4 and not mxu_reduce:
        per_row += 3 * dim * 4                      # f32 upcasts of a/p/n
    per_row += 2 * dim * max(itemsize, 4)           # product / reduce temps

    tb = max(1, budget_bytes // per_row)
    # Byte-targeted tiles (not a fixed row cap): ~8 MiB per input per buffer.
    tb = min(tb, max(1, per_input_tile_target // max(dim * itemsize, 1)))

    # Keep enough grid steps for megacore sharding (v7x: 2 TCs) + pipelining.
    if batch >= 4 * row_align:
        min_steps = 4
    elif batch >= 2 * row_align:
        min_steps = 2
    else:
        min_steps = 1
    tb = min(tb, batch // min_steps)

    if tb >= batch:
        return batch                                # whole batch, one tile
    tb = max(row_align, (tb // row_align) * row_align)
    return min(tb, batch)


def triplet_loss(anchor, positive, negative, margin=0.2):
    """Pallas TripletLoss forward. anchor/positive/negative: (..., D)."""
    assert anchor.shape == positive.shape == negative.shape
    dim = anchor.shape[-1]
    anchor = anchor.reshape(-1, dim)
    positive = positive.reshape(-1, dim)
    negative = negative.reshape(-1, dim)
    batch = anchor.shape[0]

    itemsize = jnp.dtype(anchor.dtype).itemsize
    mxu_reduce = anchor.dtype == jnp.bfloat16

    # Generation-aware VMEM sizing (~96 MiB limit on v5e/v6e, ~48 MiB on v7x).
    vmem_cap = _vmem_capacity_bytes()
    vmem_limit = max(32 * 1024 * 1024,
                     min(vmem_cap * 3 // 4, vmem_cap - 8 * 1024 * 1024))
    tile_budget = min(vmem_limit - 16 * 1024 * 1024, int(vmem_limit * 0.7))

    tb = _pick_block_rows(batch, dim, itemsize, mxu_reduce, tile_budget)
    nb = pl.cdiv(batch, tb)

    in_spec = pl.BlockSpec((tb, dim), lambda i: (i, 0))
    losses = pl.pallas_call(
        functools.partial(_triplet_loss_kernel, margin=float(margin),
                          mxu_reduce=mxu_reduce),
        grid=(nb,),
        out_shape=jax.ShapeDtypeStruct((batch, 1), jnp.float32),
        in_specs=[in_spec, in_spec, in_spec],
        out_specs=pl.BlockSpec((tb, 1), lambda i: (i, 0)),
        compiler_params=pltpu.CompilerParams(
            dimension_semantics=("parallel",),
            vmem_limit_bytes=int(vmem_limit),
        ),
    )(anchor, positive, negative)

    # True mean over B: out-of-bounds rows of a ragged last tile are never
    # written (Pallas masks boundary-block stores), so `losses` has exactly
    # B valid rows and there is no mean-of-means bias.
    return jnp.mean(losses)


def _triplet_loss_ref(anchor, positive, negative, margin=0.2):
    """Pure-JAX reference (matches torch.nn.functional.cosine_similarity)."""
    def cos(x, y):
        xn = jnp.maximum(jnp.linalg.norm(x, axis=-1, keepdims=True), _EPS)
        yn = jnp.maximum(jnp.linalg.norm(y, axis=-1, keepdims=True), _EPS)
        return jnp.sum((x / xn) * (y / yn), axis=-1)

    pos = cos(anchor, positive)
    neg = cos(anchor, negative)
    return jnp.mean(jnp.maximum(neg - pos + margin, 0.0))


if __name__ == "__main__":
    B, D = 8, 32  # small synthetic shapes: batch=8, embedding dim=32
    key = jax.random.PRNGKey(0)
    ka, kp, kn = jax.random.split(key, 3)
    anchor = jax.random.normal(ka, (B, D), dtype=jnp.float32)
    positive = jax.random.normal(kp, (B, D), dtype=jnp.float32)
    negative = jax.random.normal(kn, (B, D), dtype=jnp.float32)

    # f32 path: exact check against the pure-JAX reference.
    loss = triplet_loss(anchor, positive, negative, margin=0.2)
    loss = jax.block_until_ready(loss)
    ref = _triplet_loss_ref(anchor, positive, negative, margin=0.2)
    assert jnp.allclose(loss, ref, atol=1e-5, rtol=1e-5), (loss, ref)

    # bf16 path: bf16 products + MXU f32-accumulated reductions.
    loss_bf16 = triplet_loss(anchor.astype(jnp.bfloat16),
                             positive.astype(jnp.bfloat16),
                             negative.astype(jnp.bfloat16), margin=0.2)
    loss_bf16 = jax.block_until_ready(loss_bf16)
    assert jnp.allclose(loss_bf16, ref, atol=5e-2), (loss_bf16, ref)

    print("KERNEL_OK")
</pallas_src>

<mosaic_0001>
module attributes {stable_mosaic.version = 11 : i64} {
  func.func @_triplet_loss_kernel(%arg0: i32, %arg1: memref<8x32xf32, #tpu.memory_space<vmem>>, %arg2: memref<8x32xf32, #tpu.memory_space<vmem>>, %arg3: memref<8x32xf32, #tpu.memory_space<vmem>>, %arg4: memref<8x1xf32, #tpu.memory_space<vmem>>) attributes {dimension_semantics = [#tpu.dimension_semantics<parallel>], iteration_bounds = array<i64: 1>, scalar_prefetch = 0 : i64, scratch_operands = 0 : i64, tpu.core_type = #tpu.core_type<tc>, window_params = [{transform_indices = @transform_0, window_bounds = array<i64: 8, 32>}, {transform_indices = @transform_1, window_bounds = array<i64: 8, 32>}, {transform_indices = @transform_2, window_bounds = array<i64: 8, 32>}, {transform_indices = @transform_3, window_bounds = array<i64: 8, 1>}]} {
    %c0 = arith.constant 0 : index
    %c0_0 = arith.constant 0 : index
    %0 = vector.load %arg1[%c0, %c0_0] : memref<8x32xf32, #tpu.memory_space<vmem>>, vector<8x32xf32>
    %c0_1 = arith.constant 0 : index
    %c0_2 = arith.constant 0 : index
    %1 = vector.load %arg2[%c0_1, %c0_2] : memref<8x32xf32, #tpu.memory_space<vmem>>, vector<8x32xf32>
    %c0_3 = arith.constant 0 : index
    %c0_4 = arith.constant 0 : index
    %2 = vector.load %arg3[%c0_3, %c0_4] : memref<8x32xf32, #tpu.memory_space<vmem>>, vector<8x32xf32>
    %3 = arith.mulf %0, %0 : vector<8x32xf32>
    %cst = arith.constant dense<0.000000e+00> : vector<8xf32>
    %4 = vector.multi_reduction <add>, %3, %cst [1] : vector<8x32xf32> to vector<8xf32>
    %5 = vector.shape_cast %4 : vector<8xf32> to vector<8x1xf32>
    %6 = arith.mulf %1, %1 : vector<8x32xf32>
    %cst_5 = arith.constant dense<0.000000e+00> : vector<8xf32>
    %7 = vector.multi_reduction <add>, %6, %cst_5 [1] : vector<8x32xf32> to vector<8xf32>
    %8 = vector.shape_cast %7 : vector<8xf32> to vector<8x1xf32>
    %9 = arith.mulf %2, %2 : vector<8x32xf32>
    %cst_6 = arith.constant dense<0.000000e+00> : vector<8xf32>
    %10 = vector.multi_reduction <add>, %9, %cst_6 [1] : vector<8x32xf32> to vector<8xf32>
    %11 = vector.shape_cast %10 : vector<8xf32> to vector<8x1xf32>
    %12 = arith.mulf %0, %1 : vector<8x32xf32>
    %cst_7 = arith.constant dense<0.000000e+00> : vector<8xf32>
    %13 = vector.multi_reduction <add>, %12, %cst_7 [1] : vector<8x32xf32> to vector<8xf32>
    %14 = vector.shape_cast %13 : vector<8xf32> to vector<8x1xf32>
    %15 = arith.mulf %0, %2 : vector<8x32xf32>
    %cst_8 = arith.constant dense<0.000000e+00> : vector<8xf32>
    %16 = vector.multi_reduction <add>, %15, %cst_8 [1] : vector<8x32xf32> to vector<8xf32>
    %17 = vector.shape_cast %16 : vector<8xf32> to vector<8x1xf32>
    %cst_9 = arith.constant 1.000000e-16 : f32
    %18 = vector.broadcast %cst_9 : f32 to vector<8x1xf32>
    %19 = arith.maximumf %5, %18 : vector<8x1xf32>
    %20 = math.rsqrt %19 : vector<8x1xf32>
    %cst_10 = arith.constant 1.000000e-16 : f32
    %21 = vector.broadcast %cst_10 : f32 to vector<8x1xf32>
    %22 = arith.maximumf %8, %21 : vector<8x1xf32>
    %23 = math.rsqrt %22 : vector<8x1xf32>
    %cst_11 = arith.constant 1.000000e-16 : f32
    %24 = vector.broadcast %cst_11 : f32 to vector<8x1xf32>
    %25 = arith.maximumf %11, %24 : vector<8x1xf32>
    %26 = math.rsqrt %25 : vector<8x1xf32>
    %27 = arith.mulf %14, %20 : vector<8x1xf32>
    %28 = arith.mulf %27, %23 : vector<8x1xf32>
    %29 = arith.mulf %17, %20 : vector<8x1xf32>
    %30 = arith.mulf %29, %26 : vector<8x1xf32>
    %31 = arith.subf %30, %28 : vector<8x1xf32>
    %cst_12 = arith.constant 2.000000e-01 : f32
    %32 = vector.broadcast %cst_12 : f32 to vector<8x1xf32>
    %33 = arith.addf %31, %32 : vector<8x1xf32>
    %cst_13 = arith.constant 0.000000e+00 : f32
    %34 = vector.broadcast %cst_13 : f32 to vector<8x1xf32>
    %35 = arith.maximumf %33, %34 : vector<8x1xf32>
    %c0_14 = arith.constant 0 : index
    %c0_15 = arith.constant 0 : index
    %36 = vector.load %arg4[%c0_14, %c0_15] : memref<8x1xf32, #tpu.memory_space<vmem>>, vector<8x1xf32>
    tpu.vector_store %arg4[%c0_14, %c0_15], %35 {strides = array<i32>} : memref<8x1xf32, #tpu.memory_space<vmem>>, vector<8x1xf32>,
    return
  }
  func.func @transform_0(%arg0: i32) -> (i32, i32) {
    %c0_i32 = arith.constant 0 : i32
    %c0_i32_0 = arith.constant 0 : i32
    return %arg0, %c0_i32 : i32, i32
  }
  func.func @transform_1(%arg0: i32) -> (i32, i32) {
    %c0_i32 = arith.constant 0 : i32
    %c0_i32_0 = arith.constant 0 : i32
    return %arg0, %c0_i32 : i32, i32
  }
  func.func @transform_2(%arg0: i32) -> (i32, i32) {
    %c0_i32 = arith.constant 0 : i32
    %c0_i32_0 = arith.constant 0 : i32
    return %arg0, %c0_i32 : i32, i32
  }
  func.func @transform_3(%arg0: i32) -> (i32, i32) {
    %c0_i32 = arith.constant 0 : i32
    %c0_i32_0 = arith.constant 0 : i32
    return %arg0, %c0_i32 : i32, i32
  }
}

</mosaic_0001>

<llo_original>
// kernel: tpu_custom_call.1
$region0: #{tpu_custom_call.1}
  #allocation0 [shape = 'u32[]', space=smem, size = 0x4, offset = 0x4, fixed_abs, tag = 'smem constant byte address 0x4 - core index']
  #allocation1 [shape = 'u32[144,128]{1,0:T(1,128)}', space=vmem, size = 0x12000, scoped, tag = 'internal scratch']
  %s0 = inlined_call_operand.hbm [shape: f32[8,32], index: 0, kind: input, shape index: {}]
  %s1 = inlined_call_operand.hbm [shape: f32[8,32], index: 1, kind: input, shape index: {}]
  %s2 = inlined_call_operand.hbm [shape: f32[8,32], index: 2, kind: input, shape index: {}]
  %s3 = inlined_call_operand.vmem [shape: f32[8,1], index: 3, kind: output, shape index: {}]
  %s4 = sld [smem:[#allocation0]]
  $region34: #{tpu_custom_call.1} parent=0
    _
  %s6 = ssub.s32 1, %s4
  %s7 = scalar_select 0, %s6, %s4
  $region1: #{tpu_custom_call.1} parent=0
    #allocation2 [shape = 'u8[4096]{0}', space=vmem, size = 0x1000, scoped, tag = 'input window, operand 0, single buffered']
    #allocation3 [shape = 's32[1]{0}', space=sflag, size = 0x4, scoped, tag = 'scoped memory for tpu_custom_call.1']
    #allocation4 [shape = 'u8[4096]{0}', space=vmem, size = 0x1000, scoped, tag = 'input window, operand 1, single buffered']
    #allocation5 [shape = 's32[1]{0}', space=sflag, size = 0x4, scoped, tag = 'scoped memory for tpu_custom_call.1']
    #allocation6 [shape = 'u8[4096]{0}', space=vmem, size = 0x1000, scoped, tag = 'input window, operand 2, single buffered']
    %8 = vsyncpa [#allocation3], 0
    %9 = vsyncpa [#allocation5], 0
    // Predicated region
    $region2: #{tpu_custom_call.1} parent=1 // pred_check
      _
    $region3: #{tpu_custom_call.1} parent=1 // pred_check_branch
      %11 = sbr.rel (0) target = $region5
    $region4: #{tpu_custom_call.1} parent=1 // pred_region
      %s13 = ssub.s32 128, 128
      %14 = vsyncadd [#allocation3], %s13
      %s16 = sshll.u32 [#allocation2], 4
      %s17 = int_to_ptr.vmem [resolvable:$true] %s16
      %19 = dma.hbm_to_vmem [thread:$0]  %s0, 128, %s17, [#allocation3]
    $region5: #{tpu_custom_call.1} parent=1 // pred_fallthru
      _
    // Predicated region
    $region6: #{tpu_custom_call.1} parent=1 // pred_check
      _
    $region7: #{tpu_custom_call.1} parent=1 // pred_check_branch
      %21 = sbr.rel (0) target = $region9
    $region8: #{tpu_custom_call.1} parent=1 // pred_region
      %s23 = ssub.s32 128, 128
      %24 = vsyncadd [#allocation5], %s23
      %s26 = sshll.u32 [#allocation4], 4
      %s27 = int_to_ptr.vmem [resolvable:$true] %s26
      %29 = dma.hbm_to_vmem [thread:$0]  %s1, 128, %s27, [#allocation5]
    $region9: #{tpu_custom_call.1} parent=1 // pred_fallthru
      _
    // Predicated region
    $region10: #{tpu_custom_call.1} parent=1 // pred_check
      _
    $region11: #{tpu_custom_call.1} parent=1 // pred_check_branch
      %31 = sbr.rel (0) target = $region13
    $region12: #{tpu_custom_call.1} parent=1 // pred_region
      %s33 = ssub.s32 128, 128
      %34 = vsyncadd [#allocation5], %s33
      %s36 = sshll.u32 [#allocation6], 4
      %s37 = int_to_ptr.vmem [resolvable:$true] %s36
      %39 = dma.hbm_to_vmem [thread:$0]  %s2, 128, %s37, [#allocation5]
    $region13: #{tpu_custom_call.1} parent=1 // pred_fallthru
      _
    // Predicated region
    $region14: #{tpu_custom_call.1} parent=1 // pred_check
      _
    $region15: #{tpu_custom_call.1} parent=1 // pred_check_branch
      %41 = sbr.rel (0) target = $region17
    $region16: #{tpu_custom_call.1} parent=1 // pred_region
      %42 = dma.done [#allocation3], 128
    $region17: #{tpu_custom_call.1} parent=1 // pred_fallthru
      _
    // Predicated region
    $region18: #{tpu_custom_call.1} parent=1 // pred_check
      _
    $region19: #{tpu_custom_call.1} parent=1 // pred_check_branch
      %44 = sbr.rel (0) target = $region21
    $region20: #{tpu_custom_call.1} parent=1 // pred_region
      %45 = dma.done [#allocation5], 128
    $region21: #{tpu_custom_call.1} parent=1 // pred_fallthru
      _
    // Predicated region
    $region22: #{tpu_custom_call.1} parent=1 // pred_check
      _
    $region23: #{tpu_custom_call.1} parent=1 // pred_check_branch
      %47 = sbr.rel (0) target = $region25
    $region24: #{tpu_custom_call.1} parent=1 // pred_region
      %48 = dma.done [#allocation5], 128
    $region25: #{tpu_custom_call.1} parent=1 // pred_fallthru
      _
    %v49 = vld [vmem:[#allocation2] sm:$0xff]
    %v50 = vld [vmem:[#allocation4] sm:$0xff]
    %v51 = vld [vmem:[#allocation6] sm:$0xff]
    %v52 = vmul.f32 %v49, %v49
    %vm53 = vcmask 261120
    %v54 = vsel %vm53, %v52, 0.0
    %55 = vadd.xlane.f32.xlu0 %v54
    %v56 = vpop.xlane.xlu0 %55
    %v57 = vmul.f32 %v50, %v50
    %v58 = vsel %vm53, %v57, 0.0
    %59 = vadd.xlane.f32.xlu0 %v58
    %v60 = vpop.xlane.xlu0 %59
    %v61 = vmul.f32 %v51, %v51
    %v62 = vsel %vm53, %v61, 0.0
    %63 = vadd.xlane.f32.xlu0 %v62
    %v64 = vpop.xlane.xlu0 %63
    %v65 = vmul.f32 %v49, %v50
    %v66 = vsel %vm53, %v65, 0.0
    %67 = vadd.xlane.f32.xlu0 %v66
    %v68 = vpop.xlane.xlu0 %67
    %v69 = vmul.f32 %v49, %v51
    %v70 = vsel %vm53, %v69, 0.0
    %71 = vadd.xlane.f32.xlu0 %v70
    %v72 = vpop.xlane.xlu0 %71
    %v73 = vmax.f32 %v56, 1e-16
    %v74 = vrsqrt.pop %v73
    %v75 = vmax.f32 %v60, 1e-16
    %v76 = vrsqrt.pop %v75
    %v77 = vmax.f32 %v64, 1e-16
    %v78 = vrsqrt.pop %v77
    %v79 = vmul.f32 %v68, %v74
    %v80 = vmul.f32 %v79, %v76
    %v81 = vmul.f32 %v72, %v74
    %v82 = vmul.f32 %v81, %v78
    %v83 = vsub.f32 %v82, %v80
    %v84 = vadd.f32 %v83, 0.2
    %v85 = vmax.f32 %v84, 0.0
    %vm86 = vcmask 7168
    %87 = vst.msk [vmem:[%s3] sm:$0xff] %vm86, %v85
    // Predicated region
    $region26: #{tpu_custom_call.1} parent=1 // pred_check
      _
    $region27: #{tpu_custom_call.1} parent=1 // pred_check_branch
      %89 = sbr.rel (0) target = $region29
    $region28: #{tpu_custom_call.1} parent=1 // pred_region
      _
    $region29: #{tpu_custom_call.1} parent=1 // pred_fallthru
      _
    // Predicated region
    $region30: #{tpu_custom_call.1} parent=1 // pred_check
      _
    $region31: #{tpu_custom_call.1} parent=1 // pred_check_branch
      %91 = sbr.rel (0) target = $region33
    $region32: #{tpu_custom_call.1} parent=1 // pred_region
      _
    $region33: #{tpu_custom_call.1} parent=1 // pred_fallthru
      _
    %92 = vsyncpa [#allocation3], 1
    %93 = vsyncpa [#allocation5], 1

</llo_original>
